<compile_context>
chip_gen: v6e
topology: v6e:2x2x1
jax: 0.10.0
libtpu: 0.0.40
codegen_flags: <defaults>
</compile_context>

<pallas_src>
import jax
import jax.numpy as jnp
from jax.experimental import pallas as pl
from jax.experimental.pallas import tpu as pltpu


def _round_up(v, m):
    return ((v + m - 1) // m) * m


def _vmem_budget_bytes():
    """Per-generation VMEM budget (7/8 of physical capacity, leaving headroom
    for Mosaic-internal scratch): ~112 MiB on v5e/v6e, ~56 MiB on v7x."""
    cap = 64 << 20                       # conservative fallback
    try:
        info = pltpu.get_tpu_info()
        cap = int(getattr(info, "vmem_capacity_bytes", cap))
    except Exception:
        pass
    return (cap * 7) // 8


# ---------------------------------------------------------------------------
# Kernels
# ---------------------------------------------------------------------------
def _popdx_kernel_resident(x_ref, w1_ref, b1_ref, w2_ref, b2_ref, yembT_ref,
                           o_ref):
    """1-D grid over batch tiles; all weights + y_emb^T are VMEM resident."""
    h = jnp.dot(x_ref[...], w1_ref[...],
                preferred_element_type=jnp.float32) + b1_ref[...]
    e = jnp.dot(h.astype(w2_ref.dtype), w2_ref[...],
                preferred_element_type=jnp.float32) + b2_ref[...]
    e = jnp.maximum(e, 0.0)
    o_ref[...] = jnp.dot(e.astype(yembT_ref.dtype), yembT_ref[...],
                         preferred_element_type=jnp.float32)


def _popdx_kernel_label_tiled(x_ref, w1_ref, b1_ref, w2_ref, b2_ref,
                              yembT_ref, o_ref, e_ref):
    """2-D grid (batch, label); label axis innermost.  The two Linear layers +
    ReLU run once per batch tile; relu(e) (already in the compute dtype) stays
    resident in VMEM scratch across the label tiles."""
    @pl.when(pl.program_id(1) == 0)
    def _():
        h = jnp.dot(x_ref[...], w1_ref[...],
                    preferred_element_type=jnp.float32) + b1_ref[...]
        e = jnp.dot(h.astype(w2_ref.dtype), w2_ref[...],
                    preferred_element_type=jnp.float32) + b2_ref[...]
        e_ref[...] = jnp.maximum(e, 0.0).astype(e_ref.dtype)

    o_ref[...] = jnp.dot(e_ref[...], yembT_ref[...],
                         preferred_element_type=jnp.float32)


# ---------------------------------------------------------------------------
# One-time model preparation (hoisted out of the per-call path)
# ---------------------------------------------------------------------------
def prepare_popdx_params(w1, b1, w2, b2, y_emb, *, compute_dtype=jnp.bfloat16):
    """Zero-pad all weight dims to multiples of 128, pre-transpose y_emb to
    (E, L) and cast the matmul operands to the MXU compute dtype (bf16).
    Shapes: w1:(F,H)  b1:(H,)/(1,H)  w2:(H,E)  b2:(E,)/(1,E)  y_emb:(L,E)
    (PyTorch nn.Linear stores weight as (out,in); pass it transposed to (in,out).)"""
    F, H = w1.shape
    H2, E = w2.shape
    L, E2 = y_emb.shape
    assert H2 == H and E2 == E

    F_pad = _round_up(F, 128)
    H_pad = _round_up(H, 128)
    E_pad = _round_up(E, 128)
    # Pad L so 512/256-wide label tiles always divide it when L is large.
    L_pad = _round_up(L, 128) if L <= 512 else _round_up(L, 512)

    cd, f32 = compute_dtype, jnp.float32
    w1_p = jnp.zeros((F_pad, H_pad), cd).at[:F, :H].set(w1.astype(cd))
    b1_p = jnp.zeros((1, H_pad), f32).at[:, :H].set(
        jnp.reshape(b1, (1, H)).astype(f32))
    w2_p = jnp.zeros((H_pad, E_pad), cd).at[:H, :E].set(w2.astype(cd))
    b2_p = jnp.zeros((1, E_pad), f32).at[:, :E].set(
        jnp.reshape(b2, (1, E)).astype(f32))
    yembT_p = jnp.zeros((E_pad, L_pad), cd).at[:E, :L].set(y_emb.T.astype(cd))

    return dict(w1=w1_p, b1=b1_p, w2=w2_p, b2=b2_p, yembT=yembT_p,
                dims=(F, H, E, L), compute_dtype=cd)


# ---------------------------------------------------------------------------
# Forward
# ---------------------------------------------------------------------------
def popdx_forward(x, params, *, batch_tile=None):
    """x: (B, feature_num) float -> (B, label_num) float32."""
    F, H, E, L = params["dims"]
    cd = params["compute_dtype"]
    w1_p, b1_p = params["w1"], params["b1"]
    w2_p, b2_p = params["w2"], params["b2"]
    yembT_p = params["yembT"]
    F_pad, H_pad = w1_p.shape
    E_pad, L_pad = yembT_p.shape

    B = x.shape[0]
    assert x.shape[1] == F
    itemsize = jnp.dtype(cd).itemsize
    sub = (8 * 4) // itemsize            # sublane multiple: 8 (f32) / 16 (bf16)

    # ---- batch tiling: sublane aligned, >=2 tiles when B allows (v7x MC) ---
    if batch_tile is None:
        TB = min(256, _round_up(B, sub))
        if _round_up(B, TB) == TB and B >= 2 * sub:
            TB = _round_up((B + 1) // 2, sub)     # give both v7x TCs a tile
    else:
        TB = _round_up(batch_tile, sub)
    B_pad = _round_up(B, TB)
    nbt = B_pad // TB

    # ---- VMEM budget & label-axis decision ---------------------------------
    budget = _vmem_budget_bytes()

    def _vmem_estimate(tl, resident_yemb):
        b = 2 * TB * F_pad * itemsize                          # x (2 bufs)
        b += (F_pad * H_pad + H_pad * E_pad) * itemsize        # W1, W2 (1 buf)
        b += (H_pad + E_pad) * 4                               # biases (f32)
        b += TB * (H_pad + E_pad) * (4 + itemsize)             # h / e + casts
        if resident_yemb:
            b += E_pad * L_pad * itemsize                      # y_emb^T (1 buf)
            b += 2 * TB * L_pad * 4                            # out (f32, 2 bufs)
        else:
            b += 2 * E_pad * tl * itemsize                     # y_emb^T tiles
            b += 2 * TB * tl * 4                               # out tiles
            b += TB * E_pad * itemsize                         # relu(e) scratch
        return b

    use_resident = _vmem_estimate(L_pad, True) <= budget
    if use_resident:
        TL = L_pad
    else:
        TL = 128
        for cand in (512, 256):
            if L_pad % cand == 0 and _vmem_estimate(cand, False) <= budget:
                TL = cand
                break
    # TODO(synk): for very large feature_num/hidden_size add a K-reduction grid axis over F (innermost, "arbitrary", f32 h-accumulator scratch) so x/W1 stream in K-slabs instead of residing whole in VMEM (matters first on v7x's 64 MiB).

    # ---- per-call input padding (weights were prepared once) ---------------
    x_p = jnp.zeros((B_pad, F_pad), cd).at[:B, :F].set(x.astype(cd))

    # ---- advisory cost estimate (accounts for y_emb^T re-streaming) --------
    flops = 2 * B_pad * (F_pad * H_pad + H_pad * E_pad + E_pad * L_pad)
    yemb_stream = (1 if use_resident else nbt) * E_pad * L_pad * itemsize
    bytes_accessed = (B_pad * F_pad * itemsize
                      + (F_pad * H_pad + H_pad * E_pad) * itemsize
                      + (H_pad + E_pad) * 4
                      + yemb_stream
                      + B_pad * L_pad * 4)
    cost = pl.CostEstimate(flops=int(flops), transcendentals=0,
                           bytes_accessed=int(bytes_accessed))

    def build(single_buffer_weights):
        def const_spec(shape, idx_map):
            # Blocks whose index never changes: single-buffer to halve VMEM.
            if single_buffer_weights:
                return pl.BlockSpec(shape, idx_map, pipeline_mode=pl.Buffered(1))
            return pl.BlockSpec(shape, idx_map)

        if use_resident:
            grid = (nbt,)
            in_specs = [
                pl.BlockSpec((TB, F_pad), lambda i: (i, 0)),        # x tile
                const_spec((F_pad, H_pad), lambda i: (0, 0)),       # W1
                const_spec((1, H_pad), lambda i: (0, 0)),           # b1
                const_spec((H_pad, E_pad), lambda i: (0, 0)),       # W2
                const_spec((1, E_pad), lambda i: (0, 0)),           # b2
                const_spec((E_pad, L_pad), lambda i: (0, 0)),       # y_emb^T
            ]
            out_specs = pl.BlockSpec((TB, L_pad), lambda i: (i, 0))
            scratch_shapes = ()
            kernel = _popdx_kernel_resident
            dim_sem = ("parallel",)
        else:
            grid = (nbt, L_pad // TL)
            in_specs = [
                pl.BlockSpec((TB, F_pad), lambda i, j: (i, 0)),     # x tile
                const_spec((F_pad, H_pad), lambda i, j: (0, 0)),    # W1
                const_spec((1, H_pad), lambda i, j: (0, 0)),        # b1
                const_spec((H_pad, E_pad), lambda i, j: (0, 0)),    # W2
                const_spec((1, E_pad), lambda i, j: (0, 0)),        # b2
                pl.BlockSpec((E_pad, TL), lambda i, j: (0, j)),     # y_emb^T tile
            ]
            out_specs = pl.BlockSpec((TB, TL), lambda i, j: (i, j))
            scratch_shapes = (pltpu.VMEM((TB, E_pad), cd),)         # relu(e)
            kernel = _popdx_kernel_label_tiled
            dim_sem = ("parallel", "arbitrary")  # label axis carries scratch

        return pl.pallas_call(
            kernel,
            out_shape=jax.ShapeDtypeStruct((B_pad, L_pad), jnp.float32),
            grid_spec=pltpu.PrefetchScalarGridSpec(
                num_scalar_prefetch=0,
                grid=grid,
                in_specs=in_specs,
                out_specs=out_specs,
                scratch_shapes=scratch_shapes),
            compiler_params=pltpu.CompilerParams(
                dimension_semantics=dim_sem,
                vmem_limit_bytes=int(budget)),
            cost_estimate=cost,
        )

    args = (x_p, w1_p, b1_p, w2_p, b2_p, yembT_p)
    try:
        out_pad = build(True)(*args)
    except Exception:
        # Buffered(1) is a pure VMEM optimization; fall back to the default
        # double-buffered pipeline if this jax build rejects single-buffering.
        out_pad = build(False)(*args)

    return out_pad[:B, :L]


# ---------------------------------------------------------------------------
# Pure-JAX reference
# ---------------------------------------------------------------------------
def reference_forward(x, w1, b1, w2, b2, y_emb, *, dtype=jnp.float32):
    """`dtype` is the matmul-input precision (accumulation always f32)."""
    f32 = jnp.float32
    h = jnp.dot(x.astype(dtype), w1.astype(dtype),
                preferred_element_type=f32) + jnp.reshape(b1, (1, -1)).astype(f32)
    e = jnp.dot(h.astype(dtype), w2.astype(dtype),
                preferred_element_type=f32) + jnp.reshape(b2, (1, -1)).astype(f32)
    e = jnp.maximum(e, 0.0)
    return jnp.dot(e.astype(dtype), y_emb.T.astype(dtype),
                   preferred_element_type=f32)


if __name__ == "__main__":
    # Small shapes consistent with the module.
    batch = 16
    feature_num = 32
    hidden_size = 64
    label_num = 10
    y_emb_dim = 24

    key = jax.random.PRNGKey(0)
    kx, kw1, kb1, kw2, kb2, kemb = jax.random.split(key, 6)

    x = jax.random.normal(kx, (batch, feature_num), dtype=jnp.float32)
    # Parameters stored as (in, out) == PyTorch Linear weight transposed.
    w1 = jax.random.normal(kw1, (feature_num, hidden_size), dtype=jnp.float32) * (
        (2.0 / feature_num) ** 0.5)
    b1 = jax.random.normal(kb1, (hidden_size,), dtype=jnp.float32) * 0.01
    w2 = jax.random.normal(kw2, (hidden_size, y_emb_dim), dtype=jnp.float32) * (
        (2.0 / hidden_size) ** 0.5)
    b2 = jax.random.normal(kb2, (y_emb_dim,), dtype=jnp.float32) * 0.01
    y_emb = jax.random.normal(kemb, (label_num, y_emb_dim), dtype=jnp.float32)

    params = prepare_popdx_params(w1, b1, w2, b2, y_emb)      # one-time prep
    out = jax.block_until_ready(popdx_forward(x, params))
    assert out.shape == (batch, label_num)

    # Reference with matching bf16-input / f32-accumulate numerics.
    ref_bf16 = reference_forward(x, w1, b1, w2, b2, y_emb, dtype=jnp.bfloat16)
    assert jnp.allclose(out, ref_bf16, atol=2e-2, rtol=2e-2), "mismatch vs bf16 reference"

    # Loose sanity check against the exact f32 reference (bf16 input rounding).
    ref_f32 = reference_forward(x, w1, b1, w2, b2, y_emb, dtype=jnp.float32)
    max_err = float(jnp.max(jnp.abs(out - ref_f32)))
    scale = max(1.0, float(jnp.max(jnp.abs(ref_f32))))
    assert max_err <= 5e-2 * scale, f"error vs f32 reference too large: {max_err}"

    print("KERNEL_OK")
</pallas_src>

<mosaic_0001>
module attributes {stable_mosaic.version = 11 : i64} {
  func.func @_popdx_kernel_resident(%arg0: i32, %arg1: memref<16x128xbf16, #tpu.memory_space<vmem>>, %arg2: memref<128x128xbf16, #tpu.memory_space<vmem>>, %arg3: memref<1x128xf32, #tpu.memory_space<vmem>>, %arg4: memref<128x128xbf16, #tpu.memory_space<vmem>>, %arg5: memref<1x128xf32, #tpu.memory_space<vmem>>, %arg6: memref<128x128xbf16, #tpu.memory_space<vmem>>, %arg7: memref<16x128xf32, #tpu.memory_space<vmem>>) attributes {dimension_semantics = [#tpu.dimension_semantics<parallel>], iteration_bounds = array<i64: 1>, scalar_prefetch = 0 : i64, scratch_operands = 0 : i64, tpu.core_type = #tpu.core_type<tc>, window_params = [{transform_indices = @transform_0, window_bounds = array<i64: 16, 128>}, {pipeline_mode = #tpu.pipeline_mode<synchronous>, transform_indices = @transform_1, window_bounds = array<i64: 128, 128>}, {pipeline_mode = #tpu.pipeline_mode<synchronous>, transform_indices = @transform_2, window_bounds = array<i64: 1, 128>}, {pipeline_mode = #tpu.pipeline_mode<synchronous>, transform_indices = @transform_3, window_bounds = array<i64: 128, 128>}, {pipeline_mode = #tpu.pipeline_mode<synchronous>, transform_indices = @transform_4, window_bounds = array<i64: 1, 128>}, {pipeline_mode = #tpu.pipeline_mode<synchronous>, transform_indices = @transform_5, window_bounds = array<i64: 128, 128>}, {transform_indices = @transform_6, window_bounds = array<i64: 16, 128>}]} {
    %c0 = arith.constant 0 : index
    %c0_0 = arith.constant 0 : index
    %0 = vector.load %arg1[%c0, %c0_0] : memref<16x128xbf16, #tpu.memory_space<vmem>>, vector<16x128xbf16>
    %c0_1 = arith.constant 0 : index
    %c0_2 = arith.constant 0 : index
    %1 = vector.load %arg2[%c0_1, %c0_2] : memref<128x128xbf16, #tpu.memory_space<vmem>>, vector<128x128xbf16>
    %cst = arith.constant dense<0.000000e+00> : vector<16x128xf32>
    %2 = tpu.matmul %0, %1, %cst {dimension_numbers = #tpu.dot_dimension_numbers<[1], [0], [0], [1], [0, 0, 1, 1], [], []>} : vector<16x128xbf16>, vector<128x128xbf16>, vector<16x128xf32> -> vector<16x128xf32>
    %c0_3 = arith.constant 0 : index
    %c0_4 = arith.constant 0 : index
    %3 = vector.load %arg3[%c0_3, %c0_4] : memref<1x128xf32, #tpu.memory_space<vmem>>, vector<1x128xf32>
    %4 = vector.broadcast %3 : vector<1x128xf32> to vector<16x128xf32>
    %5 = arith.addf %2, %4 : vector<16x128xf32>
    %6 = arith.truncf %5 : vector<16x128xf32> to vector<16x128xbf16>
    %c0_5 = arith.constant 0 : index
    %c0_6 = arith.constant 0 : index
    %7 = vector.load %arg4[%c0_5, %c0_6] : memref<128x128xbf16, #tpu.memory_space<vmem>>, vector<128x128xbf16>
    %cst_7 = arith.constant dense<0.000000e+00> : vector<16x128xf32>
    %8 = tpu.matmul %6, %7, %cst_7 {dimension_numbers = #tpu.dot_dimension_numbers<[1], [0], [0], [1], [0, 0, 1, 1], [], []>} : vector<16x128xbf16>, vector<128x128xbf16>, vector<16x128xf32> -> vector<16x128xf32>
    %c0_8 = arith.constant 0 : index
    %c0_9 = arith.constant 0 : index
    %9 = vector.load %arg5[%c0_8, %c0_9] : memref<1x128xf32, #tpu.memory_space<vmem>>, vector<1x128xf32>
    %10 = vector.broadcast %9 : vector<1x128xf32> to vector<16x128xf32>
    %11 = arith.addf %8, %10 : vector<16x128xf32>
    %cst_10 = arith.constant 0.000000e+00 : f32
    %12 = vector.broadcast %cst_10 : f32 to vector<16x128xf32>
    %13 = arith.maximumf %11, %12 : vector<16x128xf32>
    %14 = arith.truncf %13 : vector<16x128xf32> to vector<16x128xbf16>
    %c0_11 = arith.constant 0 : index
    %c0_12 = arith.constant 0 : index
    %15 = vector.load %arg6[%c0_11, %c0_12] : memref<128x128xbf16, #tpu.memory_space<vmem>>, vector<128x128xbf16>
    %cst_13 = arith.constant dense<0.000000e+00> : vector<16x128xf32>
    %16 = tpu.matmul %14, %15, %cst_13 {dimension_numbers = #tpu.dot_dimension_numbers<[1], [0], [0], [1], [0, 0, 1, 1], [], []>} : vector<16x128xbf16>, vector<128x128xbf16>, vector<16x128xf32> -> vector<16x128xf32>
    %c0_14 = arith.constant 0 : index
    %c0_15 = arith.constant 0 : index
    %17 = vector.load %arg7[%c0_14, %c0_15] : memref<16x128xf32, #tpu.memory_space<vmem>>, vector<16x128xf32>
    tpu.vector_store %arg7[%c0_14, %c0_15], %16 {strides = array<i32>} : memref<16x128xf32, #tpu.memory_space<vmem>>, vector<16x128xf32>,
    return
  }
  func.func @transform_0(%arg0: i32) -> (i32, i32) {
    %c0_i32 = arith.constant 0 : i32
    %c0_i32_0 = arith.constant 0 : i32
    return %arg0, %c0_i32 : i32, i32
  }
  func.func @transform_1(%arg0: i32) -> (i32, i32) {
    %c0_i32 = arith.constant 0 : i32
    %c0_i32_0 = arith.constant 0 : i32
    %c0_i32_1 = arith.constant 0 : i32
    return %c0_i32, %c0_i32_0 : i32, i32
  }
  func.func @transform_2(%arg0: i32) -> (i32, i32) {
    %c0_i32 = arith.constant 0 : i32
    %c0_i32_0 = arith.constant 0 : i32
    %c0_i32_1 = arith.constant 0 : i32
    return %c0_i32, %c0_i32_0 : i32, i32
  }
  func.func @transform_3(%arg0: i32) -> (i32, i32) {
    %c0_i32 = arith.constant 0 : i32
    %c0_i32_0 = arith.constant 0 : i32
    %c0_i32_1 = arith.constant 0 : i32
    return %c0_i32, %c0_i32_0 : i32, i32
  }
  func.func @transform_4(%arg0: i32) -> (i32, i32) {
    %c0_i32 = arith.constant 0 : i32
    %c0_i32_0 = arith.constant 0 : i32
    %c0_i32_1 = arith.constant 0 : i32
    return %c0_i32, %c0_i32_0 : i32, i32
  }
  func.func @transform_5(%arg0: i32) -> (i32, i32) {
    %c0_i32 = arith.constant 0 : i32
    %c0_i32_0 = arith.constant 0 : i32
    %c0_i32_1 = arith.constant 0 : i32
    return %c0_i32, %c0_i32_0 : i32, i32
  }
  func.func @transform_6(%arg0: i32) -> (i32, i32) {
    %c0_i32 = arith.constant 0 : i32
    %c0_i32_0 = arith.constant 0 : i32
    return %arg0, %c0_i32 : i32, i32
  }
}

module attributes {stable_mosaic.version = 11 : i64} {
  func.func @_popdx_kernel_resident(%arg0: i32, %arg1: memref<16x128xbf16, #tpu.memory_space<vmem>>, %arg2: memref<128x128xbf16, #tpu.memory_space<vmem>>, %arg3: memref<1x128xf32, #tpu.memory_space<vmem>>, %arg4: memref<128x128xbf16, #tpu.memory_space<vmem>>, %arg5: memref<1x128xf32, #tpu.memory_space<vmem>>, %arg6: memref<128x128xbf16, #tpu.memory_space<vmem>>, %arg7: memref<16x128xf32, #tpu.memory_space<vmem>>) attributes {dimension_semantics = [#tpu.dimension_semantics<parallel>], iteration_bounds = array<i64: 1>, scalar_prefetch = 0 : i64, scratch_operands = 0 : i64, tpu.core_type = #tpu.core_type<tc>, window_params = [{transform_indices = @transform_0, window_bounds = array<i64: 16, 128>}, {pipeline_mode = #tpu.pipeline_mode<synchronous>, transform_indices = @transform_1, window_bounds = array<i64: 128, 128>}, {pipeline_mode = #tpu.pipeline_mode<synchronous>, transform_indices = @transform_2, window_bounds = array<i64: 1, 128>}, {pipeline_mode = #tpu.pipeline_mode<synchronous>, transform_indices = @transform_3, window_bounds = array<i64: 128, 128>}, {pipeline_mode = #tpu.pipeline_mode<synchronous>, transform_indices = @transform_4, window_bounds = array<i64: 1, 128>}, {pipeline_mode = #tpu.pipeline_mode<synchronous>, transform_indices = @transform_5, window_bounds = array<i64: 128, 128>}, {transform_indices = @transform_6, window_bounds = array<i64: 16, 128>}]} {
    %c0 = arith.constant 0 : index
    %c0_0 = arith.constant 0 : index
    %0 = vector.load %arg1[%c0, %c0_0] : memref<16x128xbf16, #tpu.memory_space<vmem>>, vector<16x128xbf16>
    %c0_1 = arith.constant 0 : index
    %c0_2 = arith.constant 0 : index
    %1 = vector.load %arg2[%c0_1, %c0_2] : memref<128x128xbf16, #tpu.memory_space<vmem>>, vector<128x128xbf16>
    %cst = arith.constant dense<0.000000e+00> : vector<16x128xf32>
    %2 = tpu.matmul %0, %1, %cst {dimension_numbers = #tpu.dot_dimension_numbers<[1], [0], [0], [1], [0, 0, 1, 1], [], []>} : vector<16x128xbf16>, vector<128x128xbf16>, vector<16x128xf32> -> vector<16x128xf32>
    %c0_3 = arith.constant 0 : index
    %c0_4 = arith.constant 0 : index
    %3 = vector.load %arg3[%c0_3, %c0_4] : memref<1x128xf32, #tpu.memory_space<vmem>>, vector<1x128xf32>
    %4 = vector.broadcast %3 : vector<1x128xf32> to vector<16x128xf32>
    %5 = arith.addf %2, %4 : vector<16x128xf32>
    %6 = arith.truncf %5 : vector<16x128xf32> to vector<16x128xbf16>
    %c0_5 = arith.constant 0 : index
    %c0_6 = arith.constant 0 : index
    %7 = vector.load %arg4[%c0_5, %c0_6] : memref<128x128xbf16, #tpu.memory_space<vmem>>, vector<128x128xbf16>
    %cst_7 = arith.constant dense<0.000000e+00> : vector<16x128xf32>
    %8 = tpu.matmul %6, %7, %cst_7 {dimension_numbers = #tpu.dot_dimension_numbers<[1], [0], [0], [1], [0, 0, 1, 1], [], []>} : vector<16x128xbf16>, vector<128x128xbf16>, vector<16x128xf32> -> vector<16x128xf32>
    %c0_8 = arith.constant 0 : index
    %c0_9 = arith.constant 0 : index
    %9 = vector.load %arg5[%c0_8, %c0_9] : memref<1x128xf32, #tpu.memory_space<vmem>>, vector<1x128xf32>
    %10 = vector.broadcast %9 : vector<1x128xf32> to vector<16x128xf32>
    %11 = arith.addf %8, %10 : vector<16x128xf32>
    %cst_10 = arith.constant 0.000000e+00 : f32
    %12 = vector.broadcast %cst_10 : f32 to vector<16x128xf32>
    %13 = arith.maximumf %11, %12 : vector<16x128xf32>
    %14 = arith.truncf %13 : vector<16x128xf32> to vector<16x128xbf16>
    %c0_11 = arith.constant 0 : index
    %c0_12 = arith.constant 0 : index
    %15 = vector.load %arg6[%c0_11, %c0_12] : memref<128x128xbf16, #tpu.memory_space<vmem>>, vector<128x128xbf16>
    %cst_13 = arith.constant dense<0.000000e+00> : vector<16x128xf32>
    %16 = tpu.matmul %14, %15, %cst_13 {dimension_numbers = #tpu.dot_dimension_numbers<[1], [0], [0], [1], [0, 0, 1, 1], [], []>} : vector<16x128xbf16>, vector<128x128xbf16>, vector<16x128xf32> -> vector<16x128xf32>
    %c0_14 = arith.constant 0 : index
    %c0_15 = arith.constant 0 : index
    %17 = vector.load %arg7[%c0_14, %c0_15] : memref<16x128xf32, #tpu.memory_space<vmem>>, vector<16x128xf32>
    tpu.vector_store %arg7[%c0_14, %c0_15], %16 {strides = array<i32>} : memref<16x128xf32, #tpu.memory_space<vmem>>, vector<16x128xf32>,
    return
  }
  func.func @transform_0(%arg0: i32) -> (i32, i32) {
    %c0_i32 = arith.constant 0 : i32
    %c0_i32_0 = arith.constant 0 : i32
    return %arg0, %c0_i32 : i32, i32
  }
  func.func @transform_1(%arg0: i32) -> (i32, i32) {
    %c0_i32 = arith.constant 0 : i32
    %c0_i32_0 = arith.constant 0 : i32
    %c0_i32_1 = arith.constant 0 : i32
    return %c0_i32, %c0_i32_0 : i32, i32
  }
  func.func @transform_2(%arg0: i32) -> (i32, i32) {
    %c0_i32 = arith.constant 0 : i32
    %c0_i32_0 = arith.constant 0 : i32
    %c0_i32_1 = arith.constant 0 : i32
    return %c0_i32, %c0_i32_0 : i32, i32
  }
  func.func @transform_3(%arg0: i32) -> (i32, i32) {
    %c0_i32 = arith.constant 0 : i32
    %c0_i32_0 = arith.constant 0 : i32
    %c0_i32_1 = arith.constant 0 : i32
    return %c0_i32, %c0_i32_0 : i32, i32
  }
  func.func @transform_4(%arg0: i32) -> (i32, i32) {
    %c0_i32 = arith.constant 0 : i32
    %c0_i32_0 = arith.constant 0 : i32
    %c0_i32_1 = arith.constant 0 : i32
    return %c0_i32, %c0_i32_0 : i32, i32
  }
  func.func @transform_5(%arg0: i32) -> (i32, i32) {
    %c0_i32 = arith.constant 0 : i32
    %c0_i32_0 = arith.constant 0 : i32
    %c0_i32_1 = arith.constant 0 : i32
    return %c0_i32, %c0_i32_0 : i32, i32
  }
  func.func @transform_6(%arg0: i32) -> (i32, i32) {
    %c0_i32 = arith.constant 0 : i32
    %c0_i32_0 = arith.constant 0 : i32
    return %arg0, %c0_i32 : i32, i32
  }
}

</mosaic_0001>

<llo_original>
// kernel: tpu_custom_call.1
$region0: #{tpu_custom_call.1}
  #allocation0 [shape = 'u32[]', space=smem, size = 0x4, offset = 0x4, fixed_abs, tag = 'smem constant byte address 0x4 - core index']
  #allocation1 [shape = 'u32[144,128]{1,0:T(1,128)}', space=vmem, size = 0x12000, scoped, tag = 'internal scratch']
  %s0 = inlined_call_operand.hbm [shape: bf16[16,128], index: 0, kind: input, shape index: {}]
  %s1 = inlined_call_operand.hbm [shape: bf16[128,128], index: 1, kind: input, shape index: {}]
  %s2 = inlined_call_operand.vmem [shape: f32[1,128], index: 2, kind: input, shape index: {}]
  %s3 = inlined_call_operand.hbm [shape: bf16[128,128], index: 3, kind: input, shape index: {}]
  %s4 = inlined_call_operand.vmem [shape: f32[1,128], index: 4, kind: input, shape index: {}]
  %s5 = inlined_call_operand.hbm [shape: bf16[128,128], index: 5, kind: input, shape index: {}]
  %s6 = inlined_call_operand.hbm [shape: f32[16,128], index: 6, kind: output, shape index: {}]
  %s7 = sld [smem:[#allocation0]]
  $region50: #{tpu_custom_call.1} parent=0
    _
  %s9 = ssub.s32 1, %s7
  %s10 = scalar_select 0, %s9, %s7
  $region1: #{tpu_custom_call.1} parent=0
    #allocation2 [shape = 'u8[4096]{0}', space=vmem, size = 0x1000, scoped, tag = 'input window, operand 0, single buffered']
    #allocation3 [shape = 's32[1]{0}', space=sflag, size = 0x4, scoped, tag = 'scoped memory for tpu_custom_call.1']
    #allocation4 [shape = 's32[1]{0}', space=sflag, size = 0x4, scoped, tag = 'scoped memory for tpu_custom_call.1']
    #allocation5 [shape = 'u8[32768]{0}', space=vmem, size = 0x8000, scoped, tag = 'input window, operand 1, single buffered']
    #allocation6 [shape = 's32[1]{0}', space=sflag, size = 0x4, scoped, tag = 'scoped memory for tpu_custom_call.1']
    #allocation7 [shape = 'u8[32768]{0}', space=vmem, size = 0x8000, scoped, tag = 'input window, operand 3, single buffered']
    #allocation8 [shape = 'u8[32768]{0}', space=vmem, size = 0x8000, scoped, tag = 'input window, operand 5, single buffered']
    #allocation9 [shape = 's32[1]{0}', space=sflag, size = 0x4, scoped, tag = 'scoped memory for tpu_custom_call.1']
    #allocation10 [shape = 'u8[8192]{0}', space=vmem, size = 0x2000, scoped, tag = 'output window, operand 0, single buffered']
    %11 = vsyncpa [#allocation3], 0
    %12 = vsyncpa [#allocation6], 0
    %13 = vsyncpa [#allocation9], 0
    %14 = vsyncpa [#allocation4], 0
    // Predicated region
    $region2: #{tpu_custom_call.1} parent=1 // pred_check
      _
    $region3: #{tpu_custom_call.1} parent=1 // pred_check_branch
      %16 = sbr.rel (0) target = $region5
    $region4: #{tpu_custom_call.1} parent=1 // pred_region
      %s18 = ssub.s32 128, 128
      %19 = vsyncadd [#allocation3], %s18
      %s20 = sshll.u32 [#allocation2], 4
      %s21 = int_to_ptr.vmem [resolvable:$true] %s20
      %26 = dma.hbm_to_vmem [thread:$0]  %s0, 128, %s21, [#allocation3], 64, 64, 4
    $region5: #{tpu_custom_call.1} parent=1 // pred_fallthru
      _
    // Predicated region
    $region6: #{tpu_custom_call.1} parent=1 // pred_check
      _
    $region7: #{tpu_custom_call.1} parent=1 // pred_check_branch
      %28 = sbr.rel (0) target = $region9
    $region8: #{tpu_custom_call.1} parent=1 // pred_region
      %s30 = ssub.s32 1024, 1024
      %31 = vsyncadd [#allocation6], %s30
      %s32 = sshll.u32 [#allocation5], 4
      %s33 = int_to_ptr.vmem [resolvable:$true] %s32
      %38 = dma.hbm_to_vmem [thread:$0]  %s1, 1024, %s33, [#allocation6], 64, 64, 4
    $region9: #{tpu_custom_call.1} parent=1 // pred_fallthru
      _
    // Predicated region
    $region10: #{tpu_custom_call.1} parent=1 // pred_check
      _
    $region11: #{tpu_custom_call.1} parent=1 // pred_check_branch
      %40 = sbr.rel (0) target = $region13
    $region12: #{tpu_custom_call.1} parent=1 // pred_region
      _
    $region13: #{tpu_custom_call.1} parent=1 // pred_fallthru
      _
    // Predicated region
    $region14: #{tpu_custom_call.1} parent=1 // pred_check
      _
    $region15: #{tpu_custom_call.1} parent=1 // pred_check_branch
      %42 = sbr.rel (0) target = $region17
    $region16: #{tpu_custom_call.1} parent=1 // pred_region
      %s44 = ssub.s32 1024, 1024
      %45 = vsyncadd [#allocation6], %s44
      %s46 = sshll.u32 [#allocation7], 4
      %s47 = int_to_ptr.vmem [resolvable:$true] %s46
      %52 = dma.hbm_to_vmem [thread:$0]  %s3, 1024, %s47, [#allocation6], 64, 64, 4
    $region17: #{tpu_custom_call.1} parent=1 // pred_fallthru
      _
    // Predicated region
    $region18: #{tpu_custom_call.1} parent=1 // pred_check
      _
    $region19: #{tpu_custom_call.1} parent=1 // pred_check_branch
      %54 = sbr.rel (0) target = $region21
    $region20: #{tpu_custom_call.1} parent=1 // pred_region
      _
    $region21: #{tpu_custom_call.1} parent=1 // pred_fallthru
      _
    // Predicated region
    $region22: #{tpu_custom_call.1} parent=1 // pred_check
      _
    $region23: #{tpu_custom_call.1} parent=1 // pred_check_branch
      %56 = sbr.rel (0) target = $region25
    $region24: #{tpu_custom_call.1} parent=1 // pred_region
      %s58 = ssub.s32 1024, 1024
      %59 = vsyncadd [#allocation9], %s58
      %s60 = sshll.u32 [#allocation8], 4
      %s61 = int_to_ptr.vmem [resolvable:$true] %s60
      %66 = dma.hbm_to_vmem [thread:$0]  %s5, 1024, %s61, [#allocation9], 64, 64, 4
    $region25: #{tpu_custom_call.1} parent=1 // pred_fallthru
      _
    // Predicated region
    $region26: #{tpu_custom_call.1} parent=1 // pred_check
      _
    $region27: #{tpu_custom_call.1} parent=1 // pred_check_branch
      %68 = sbr.rel (0) target = $region29
    $region28: #{tpu_custom_call.1} parent=1 // pred_region
      %69 = dma.done [#allocation3], 128
    $region29: #{tpu_custom_call.1} parent=1 // pred_fallthru
      _
    // Predicated region
    $region30: #{tpu_custom_call.1} parent=1 // pred_check
      _
    $region31: #{tpu_custom_call.1} parent=1 // pred_check_branch
      %71 = sbr.rel (0) target = $region33
    $region32: #{tpu_custom_call.1} parent=1 // pred_region
      %72 = dma.done [#allocation6], 1024
    $region33: #{tpu_custom_call.1} parent=1 // pred_fallthru
      _
    // Predicated region
    $region34: #{tpu_custom_call.1} parent=1 // pred_check
      _
    $region35: #{tpu_custom_call.1} parent=1 // pred_check_branch
      %74 = sbr.rel (0) target = $region37
    $region36: #{tpu_custom_call.1} parent=1 // pred_region
      %75 = dma.done [#allocation6], 1024
    $region37: #{tpu_custom_call.1} parent=1 // pred_fallthru
      _
    // Predicated region
    $region38: #{tpu_custom_call.1} parent=1 // pred_check
      _
    $region39: #{tpu_custom_call.1} parent=1 // pred_check_branch
      %77 = sbr.rel (0) target = $region41
    $region40: #{tpu_custom_call.1} parent=1 // pred_region
      %78 = dma.done [#allocation9], 1024
    $region41: #{tpu_custom_call.1} parent=1 // pred_fallthru
      _
    %v80 = vld [vmem:[#allocation2] sm:$0xf]
    %v81 = vld [vmem:[#allocation2 + $0x4] sm:$0xf]
    %v82 = vld [vmem:[#allocation5] sm:$0xf]
    %v83 = vld [vmem:[#allocation5 + $0x4] sm:$0xf]
    %v84 = vld [vmem:[#allocation5 + $0x8] sm:$0xf]
    %v85 = vld [vmem:[#allocation5 + $0xc] sm:$0xf]
    %v86 = vld [vmem:[#allocation5 + $0x10] sm:$0xf]
    %v87 = vld [vmem:[#allocation5 + $0x14] sm:$0xf]
    %v88 = vld [vmem:[#allocation5 + $0x18] sm:$0xf]
    %v89 = vld [vmem:[#allocation5 + $0x1c] sm:$0xf]
    %v90 = vld [vmem:[#allocation5 + $0x20] sm:$0xf]
    %v91 = vld [vmem:[#allocation5 + $0x24] sm:$0xf]
    %v92 = vld [vmem:[#allocation5 + $0x28] sm:$0xf]
    %v93 = vld [vmem:[#allocation5 + $0x2c] sm:$0xf]
    %v94 = vld [vmem:[#allocation5 + $0x30] sm:$0xf]
    %v95 = vld [vmem:[#allocation5 + $0x34] sm:$0xf]
    %v96 = vld [vmem:[#allocation5 + $0x38] sm:$0xf]
    %v97 = vld [vmem:[#allocation5 + $0x3c] sm:$0xf]
    %v98 = vld [vmem:[%s2] sm:$0x1]
    %v100 = vlaneseq
    %v101 = vshrl.u32 %v100, 7
    %v102 = vsub.s32 0, %v101
    %v103 = vrot.slane %v98, %v102
    %v107 = vunpack.c.l.b16 %v80
    %v108 = vunpack.c.l.b16 %v81
    %v109 = vpack.c.b16 %v108, %v107
    %v127 = vunpack.c.l.b16 %v82
    %v128 = vunpack.c.l.b16 %v83
    %v129 = vunpack.c.l.b16 %v84
    %v130 = vunpack.c.l.b16 %v85
    %v131 = vunpack.c.l.b16 %v86
    %v132 = vunpack.c.l.b16 %v87
    %v133 = vunpack.c.l.b16 %v88
    %v134 = vunpack.c.l.b16 %v89
    %v135 = vunpack.c.l.b16 %v90
    %v136 = vunpack.c.l.b16 %v91
    %v137 = vunpack.c.l.b16 %v92
    %v138 = vunpack.c.l.b16 %v93
    %v139 = vunpack.c.l.b16 %v94
    %v140 = vunpack.c.l.b16 %v95
    %v141 = vunpack.c.l.b16 %v96
    %v142 = vunpack.c.l.b16 %v97
    %v143 = vpack.c.b16 %v128, %v127
    %v144 = vpack.c.b16 %v130, %v129
    %v145 = vpack.c.b16 %v132, %v131
    %v146 = vpack.c.b16 %v134, %v133
    %v147 = vpack.c.b16 %v136, %v135
    %v148 = vpack.c.b16 %v138, %v137
    %v149 = vpack.c.b16 %v140, %v139
    %v150 = vpack.c.b16 %v142, %v141
    %159 = vmatprep.subr.bf16.mxu0 0
    %160 = vmatpush1.bf16.msra.mxu0 %v150
    %161 = vmatprep.subr.bf16.mxu0 0
    %162 = vmatpush1.bf16.msra.mxu0 %v149
    %163 = vmatprep.subr.bf16.mxu0 0
    %164 = vmatpush1.bf16.msra.mxu0 %v148
    %165 = vmatprep.subr.bf16.mxu0 0
    %166 = vmatpush1.bf16.msra.mxu0 %v147
    %167 = vmatprep.subr.bf16.mxu0 0
    %168 = vmatpush1.bf16.msra.mxu0 %v146
    %169 = vmatprep.subr.bf16.mxu0 0
    %170 = vmatpush1.bf16.msra.mxu0 %v145
    %171 = vmatprep.subr.bf16.mxu0 0
    %172 = vmatpush1.bf16.msra.mxu0 %v144
    %173 = vmatprep.subr.bf16.mxu0 0
    %174 = vmatpush1.bf16.msra.mxu0 %v143
    %175 = vmatprep.subr.bf16.mxu0 0
    %176 = vmatpush2.bf16.msra.mxu0 0
    %177 = vmatprep.subr.bf16.mxu0 0
    %178 = vmatpush2.bf16.msra.mxu0 0
    %179 = vmatprep.subr.bf16.mxu0 0
    %180 = vmatpush2.bf16.msra.mxu0 0
    %181 = vmatprep.subr.bf16.mxu0 0
    %182 = vmatpush2.bf16.msra.mxu0 0
    %183 = vmatprep.subr.bf16.mxu0 0
    %184 = vmatpush2.bf16.msra.mxu0 0
    %185 = vmatprep.subr.bf16.mxu0 0
    %186 = vmatpush2.bf16.msra.mxu0 0
    %187 = vmatprep.subr.bf16.mxu0 0
    %188 = vmatpush2.bf16.msra.mxu0 0
    %189 = vmatprep.subr.bf16.mxu0 0
    %190 = vmatpush2.bf16.msra.mxu0 0
    %191 = vmatprep.mubr.bf16.mxu0 0
    %192 = vmatmul.mubr.bf16.gmra.mxu0 %v109
    %v193 = vpop.f32.mrf.mxu0
    %v194 = vadd.f32 %v103, %v193
    %v195 = vpop.f32.mrf.mxu0
    %v196 = vpop.f32.mrf.mxu0
    %v197 = vadd.f32 %v103, %v196
    %v198 = vpop.f32.mrf.mxu0
    %199 = vdwg.mxu0
    %v200 = vpack.c.bf16 %v197, %v194
    %v201 = vld [vmem:[#allocation7] sm:$0xf]
    %v202 = vld [vmem:[#allocation7 + $0x4] sm:$0xf]
    %v203 = vld [vmem:[#allocation7 + $0x8] sm:$0xf]
    %v204 = vld [vmem:[#allocation7 + $0xc] sm:$0xf]
    %v205 = vld [vmem:[#allocation7 + $0x10] sm:$0xf]
    %v206 = vld [vmem:[#allocation7 + $0x14] sm:$0xf]
    %v207 = vld [vmem:[#allocation7 + $0x18] sm:$0xf]
    %v208 = vld [vmem:[#allocation7 + $0x1c] sm:$0xf]
    %v209 = vld [vmem:[#allocation7 + $0x20] sm:$0xf]
    %v210 = vld [vmem:[#allocation7 + $0x24] sm:$0xf]
    %v211 = vld [vmem:[#allocation7 + $0x28] sm:$0xf]
    %v212 = vld [vmem:[#allocation7 + $0x2c] sm:$0xf]
    %v213 = vld [vmem:[#allocation7 + $0x30] sm:$0xf]
    %v214 = vld [vmem:[#allocation7 + $0x34] sm:$0xf]
    %v215 = vld [vmem:[#allocation7 + $0x38] sm:$0xf]
    %v216 = vld [vmem:[#allocation7 + $0x3c] sm:$0xf]
    %v217 = vld [vmem:[%s4] sm:$0x1]
    %v219 = vlaneseq
    %v220 = vshrl.u32 %v219, 7
    %v221 = vsub.s32 0, %v220
    %v222 = vrot.slane %v217, %v221
    %v240 = vunpack.c.l.b16 %v201
    %v241 = vunpack.c.l.b16 %v202
    %v242 = vunpack.c.l.b16 %v203
    %v243 = vunpack.c.l.b16 %v204
    %v244 = vunpack.c.l.b16 %v205
    %v245 = vunpack.c.l.b16 %v206
    %v246 = vunpack.c.l.b16 %v207
    %v247 = vunpack.c.l.b16 %v208
    %v248 = vunpack.c.l.b16 %v209
    %v249 = vunpack.c.l.b16 %v210
    %v250 = vunpack.c.l.b16 %v211
    %v251 = vunpack.c.l.b16 %v212
    %v252 = vunpack.c.l.b16 %v213
    %v253 = vunpack.c.l.b16 %v214
    %v254 = vunpack.c.l.b16 %v215
    %v255 = vunpack.c.l.b16 %v216
    %v256 = vpack.c.b16 %v241, %v240
    %v257 = vpack.c.b16 %v243, %v242
    %v258 = vpack.c.b16 %v245, %v244
    %v259 = vpack.c.b16 %v247, %v246
    %v260 = vpack.c.b16 %v249, %v248
    %v261 = vpack.c.b16 %v251, %v250
    %v262 = vpack.c.b16 %v253, %v252
    %v263 = vpack.c.b16 %v255, %v254
    %272 = vmatprep.subr.bf16.mxu0 0
    %273 = vmatpush1.bf16.msra.mxu0 %v263
    %274 = vmatprep.subr.bf16.mxu0 0
    %275 = vmatpush1.bf16.msra.mxu0 %v262
    %276 = vmatprep.subr.bf16.mxu0 0
    %277 = vmatpush1.bf16.msra.mxu0 %v261
    %278 = vmatprep.subr.bf16.mxu0 0
    %279 = vmatpush1.bf16.msra.mxu0 %v260
    %280 = vmatprep.subr.bf16.mxu0 0
    %281 = vmatpush1.bf16.msra.mxu0 %v259
    %282 = vmatprep.subr.bf16.mxu0 0
    %283 = vmatpush1.bf16.msra.mxu0 %v258
    %284 = vmatprep.subr.bf16.mxu0 0
    %285 = vmatpush1.bf16.msra.mxu0 %v257
    %286 = vmatprep.subr.bf16.mxu0 0
    %287 = vmatpush1.bf16.msra.mxu0 %v256
    %288 = vmatprep.subr.bf16.mxu0 0
    %289 = vmatpush2.bf16.msra.mxu0 0
    %290 = vmatprep.subr.bf16.mxu0 0
    %291 = vmatpush2.bf16.msra.mxu0 0
    %292 = vmatprep.subr.bf16.mxu0 0
    %293 = vmatpush2.bf16.msra.mxu0 0
    %294 = vmatprep.subr.bf16.mxu0 0
    %295 = vmatpush2.bf16.msra.mxu0 0
    %296 = vmatprep.subr.bf16.mxu0 0
    %297 = vmatpush2.bf16.msra.mxu0 0
    %298 = vmatprep.subr.bf16.mxu0 0
    %299 = vmatpush2.bf16.msra.mxu0 0
    %300 = vmatprep.subr.bf16.mxu0 0
    %301 = vmatpush2.bf16.msra.mxu0 0
    %302 = vmatprep.subr.bf16.mxu0 0
    %303 = vmatpush2.bf16.msra.mxu0 0
    %304 = vmatprep.mubr.bf16.mxu0 0
    %305 = vmatmul.mubr.bf16.gmra.mxu0 %v200
    %v306 = vpop.f32.mrf.mxu0
    %v307 = vadd.f32 %v222, %v306
    %v308 = vpop.f32.mrf.mxu0
    %v309 = vpop.f32.mrf.mxu0
    %v310 = vadd.f32 %v222, %v309
    %v311 = vpop.f32.mrf.mxu0
    %312 = vdwg.mxu0
    %v313 = vmax.f32 %v307, 0.0
    %v314 = vmax.f32 %v310, 0.0
    %v315 = vpack.c.bf16 %v314, %v313
    %v316 = vld [vmem:[#allocation8] sm:$0xf]
    %v317 = vld [vmem:[#allocation8 + $0x4] sm:$0xf]
    %v318 = vld [vmem:[#allocation8 + $0x8] sm:$0xf]
    %v319 = vld [vmem:[#allocation8 + $0xc] sm:$0xf]
    %v320 = vld [vmem:[#allocation8 + $0x10] sm:$0xf]
    %v321 = vld [vmem:[#allocation8 + $0x14] sm:$0xf]
    %v322 = vld [vmem:[#allocation8 + $0x18] sm:$0xf]
    %v323 = vld [vmem:[#allocation8 + $0x1c] sm:$0xf]
    %v324 = vld [vmem:[#allocation8 + $0x20] sm:$0xf]
    %v325 = vld [vmem:[#allocation8 + $0x24] sm:$0xf]
    %v326 = vld [vmem:[#allocation8 + $0x28] sm:$0xf]
    %v327 = vld [vmem:[#allocation8 + $0x2c] sm:$0xf]
    %v328 = vld [vmem:[#allocation8 + $0x30] sm:$0xf]
    %v329 = vld [vmem:[#allocation8 + $0x34] sm:$0xf]
    %v330 = vld [vmem:[#allocation8 + $0x38] sm:$0xf]
    %v331 = vld [vmem:[#allocation8 + $0x3c] sm:$0xf]
    %v348 = vunpack.c.l.b16 %v316
    %v349 = vunpack.c.l.b16 %v317
    %v350 = vunpack.c.l.b16 %v318
    %v351 = vunpack.c.l.b16 %v319
    %v352 = vunpack.c.l.b16 %v320
    %v353 = vunpack.c.l.b16 %v321
    %v354 = vunpack.c.l.b16 %v322
    %v355 = vunpack.c.l.b16 %v323
    %v356 = vunpack.c.l.b16 %v324
    %v357 = vunpack.c.l.b16 %v325
    %v358 = vunpack.c.l.b16 %v326
    %v359 = vunpack.c.l.b16 %v327
    %v360 = vunpack.c.l.b16 %v328
    %v361 = vunpack.c.l.b16 %v329
    %v362 = vunpack.c.l.b16 %v330
    %v363 = vunpack.c.l.b16 %v331
    %v364 = vpack.c.b16 %v349, %v348
    %v365 = vpack.c.b16 %v351, %v350
    %v366 = vpack.c.b16 %v353, %v352
    %v367 = vpack.c.b16 %v355, %v354
    %v368 = vpack.c.b16 %v357, %v356
    %v369 = vpack.c.b16 %v359, %v358
    %v370 = vpack.c.b16 %v361, %v360
    %v371 = vpack.c.b16 %v363, %v362
    %380 = vmatprep.subr.bf16.mxu0 0
    %381 = vmatpush1.bf16.msra.mxu0 %v371
    %382 = vmatprep.subr.bf16.mxu0 0
    %383 = vmatpush1.bf16.msra.mxu0 %v370
    %384 = vmatprep.subr.bf16.mxu0 0
    %385 = vmatpush1.bf16.msra.mxu0 %v369
    %386 = vmatprep.subr.bf16.mxu0 0
    %387 = vmatpush1.bf16.msra.mxu0 %v368
    %388 = vmatprep.subr.bf16.mxu0 0
    %389 = vmatpush1.bf16.msra.mxu0 %v367
    %390 = vmatprep.subr.bf16.mxu0 0
    %391 = vmatpush1.bf16.msra.mxu0 %v366
    %392 = vmatprep.subr.bf16.mxu0 0
    %393 = vmatpush1.bf16.msra.mxu0 %v365
    %394 = vmatprep.subr.bf16.mxu0 0
    %395 = vmatpush1.bf16.msra.mxu0 %v364
    %396 = vmatprep.subr.bf16.mxu0 0
    %397 = vmatpush2.bf16.msra.mxu0 0
    %398 = vmatprep.subr.bf16.mxu0 0
    %399 = vmatpush2.bf16.msra.mxu0 0
    %400 = vmatprep.subr.bf16.mxu0 0
    %401 = vmatpush2.bf16.msra.mxu0 0
    %402 = vmatprep.subr.bf16.mxu0 0
    %403 = vmatpush2.bf16.msra.mxu0 0
    %404 = vmatprep.subr.bf16.mxu0 0
    %405 = vmatpush2.bf16.msra.mxu0 0
    %406 = vmatprep.subr.bf16.mxu0 0
    %407 = vmatpush2.bf16.msra.mxu0 0
    %408 = vmatprep.subr.bf16.mxu0 0
    %409 = vmatpush2.bf16.msra.mxu0 0
    %410 = vmatprep.subr.bf16.mxu0 0
    %411 = vmatpush2.bf16.msra.mxu0 0
    %412 = vmatprep.mubr.bf16.mxu0 0
    %413 = vmatmul.mubr.bf16.gmra.mxu0 %v315
    %v414 = vpop.f32.mrf.mxu0
    %v415 = vadd.f32 0.0, %v414
    %v416 = vpop.f32.mrf.mxu0
    %v417 = vpop.f32.mrf.mxu0
    %v418 = vadd.f32 0.0, %v417
    %v419 = vpop.f32.mrf.mxu0
    %420 = vdwg.mxu0
    %421 = vst [vmem:[#allocation10] sm:$0xff] %v415
    %422 = vst [vmem:[#allocation10 + $0x8] sm:$0xff] %v418
    // Predicated region
    $region42: #{tpu_custom_call.1} parent=1 // pred_check
      _
    $region43: #{tpu_custom_call.1} parent=1 // pred_check_branch
      %424 = sbr.rel (0) target = $region45
    $region44: #{tpu_custom_call.1} parent=1 // pred_region
      %s426 = ssub.s32 256, 256
      %427 = vsyncadd [#allocation4], %s426
      %s428 = sshll.u32 [#allocation10], 4
      %s429 = int_to_ptr.vmem [resolvable:$true] %s428
      %434 = dma.vmem_to_hbm [thread:$0]  %s429, 256, %s6, [#allocation4], 128, 128, 8
    $region45: #{tpu_custom_call.1} parent=1 // pred_fallthru
      _
    // Predicated region
    $region46: #{tpu_custom_call.1} parent=1 // pred_check
      _
    $region47: #{tpu_custom_call.1} parent=1 // pred_check_branch
      %436 = sbr.rel (0) target = $region49
    $region48: #{tpu_custom_call.1} parent=1 // pred_region
      %437 = dma.done [#allocation4], 256
    $region49: #{tpu_custom_call.1} parent=1 // pred_fallthru
      _
    %438 = vsyncpa [#allocation3], 1
    %439 = vsyncpa [#allocation6], 1
    %440 = vsyncpa [#allocation9], 1
    %441 = vsyncpa [#allocation4], 1

// kernel: tpu_custom_call.1
$region0: #{tpu_custom_call.1}
  #allocation0 [shape = 'u32[]', space=smem, size = 0x4, offset = 0x4, fixed_abs, tag = 'smem constant byte address 0x4 - core index']
  #allocation1 [shape = 'u32[144,128]{1,0:T(1,128)}', space=vmem, size = 0x12000, scoped, tag = 'internal scratch']
  %s0 = inlined_call_operand.hbm [shape: bf16[16,128], index: 0, kind: input, shape index: {}]
  %s1 = inlined_call_operand.hbm [shape: bf16[128,128], index: 1, kind: input, shape index: {}]
  %s2 = inlined_call_operand.vmem [shape: f32[1,128], index: 2, kind: input, shape index: {}]
  %s3 = inlined_call_operand.hbm [shape: bf16[128,128], index: 3, kind: input, shape index: {}]
  %s4 = inlined_call_operand.vmem [shape: f32[1,128], index: 4, kind: input, shape index: {}]
  %s5 = inlined_call_operand.hbm [shape: bf16[128,128], index: 5, kind: input, shape index: {}]
  %s6 = inlined_call_operand.hbm [shape: f32[16,128], index: 6, kind: output, shape index: {}]
  %s7 = sld [smem:[#allocation0]]
  $region50: #{tpu_custom_call.1} parent=0
    _
  %s9 = ssub.s32 1, %s7
  %s10 = scalar_select 0, %s9, %s7
  $region1: #{tpu_custom_call.1} parent=0
    #allocation2 [shape = 'u8[4096]{0}', space=vmem, size = 0x1000, scoped, tag = 'input window, operand 0, single buffered']
    #allocation3 [shape = 's32[1]{0}', space=sflag, size = 0x4, scoped, tag = 'scoped memory for tpu_custom_call.1']
    #allocation4 [shape = 's32[1]{0}', space=sflag, size = 0x4, scoped, tag = 'scoped memory for tpu_custom_call.1']
    #allocation5 [shape = 'u8[32768]{0}', space=vmem, size = 0x8000, scoped, tag = 'input window, operand 1, single buffered']
    #allocation6 [shape = 's32[1]{0}', space=sflag, size = 0x4, scoped, tag = 'scoped memory for tpu_custom_call.1']
    #allocation7 [shape = 'u8[32768]{0}', space=vmem, size = 0x8000, scoped, tag = 'input window, operand 3, single buffered']
    #allocation8 [shape = 'u8[32768]{0}', space=vmem, size = 0x8000, scoped, tag = 'input window, operand 5, single buffered']
    #allocation9 [shape = 's32[1]{0}', space=sflag, size = 0x4, scoped, tag = 'scoped memory for tpu_custom_call.1']
    #allocation10 [shape = 'u8[8192]{0}', space=vmem, size = 0x2000, scoped, tag = 'output window, operand 0, single buffered']
    %11 = vsyncpa [#allocation3], 0
    %12 = vsyncpa [#allocation6], 0
    %13 = vsyncpa [#allocation9], 0
    %14 = vsyncpa [#allocation4], 0
    // Predicated region
    $region2: #{tpu_custom_call.1} parent=1 // pred_check
      _
    $region3: #{tpu_custom_call.1} parent=1 // pred_check_branch
      %16 = sbr.rel (0) target = $region5
    $region4: #{tpu_custom_call.1} parent=1 // pred_region
      %s18 = ssub.s32 128, 128
      %19 = vsyncadd [#allocation3], %s18
      %s20 = sshll.u32 [#allocation2], 4
      %s21 = int_to_ptr.vmem [resolvable:$true] %s20
      %26 = dma.hbm_to_vmem [thread:$0]  %s0, 128, %s21, [#allocation3], 64, 64, 4
    $region5: #{tpu_custom_call.1} parent=1 // pred_fallthru
      _
    // Predicated region
    $region6: #{tpu_custom_call.1} parent=1 // pred_check
      _
    $region7: #{tpu_custom_call.1} parent=1 // pred_check_branch
      %28 = sbr.rel (0) target = $region9
    $region8: #{tpu_custom_call.1} parent=1 // pred_region
      %s30 = ssub.s32 1024, 1024
      %31 = vsyncadd [#allocation6], %s30
      %s32 = sshll.u32 [#allocation5], 4
      %s33 = int_to_ptr.vmem [resolvable:$true] %s32
      %38 = dma.hbm_to_vmem [thread:$0]  %s1, 1024, %s33, [#allocation6], 64, 64, 4
    $region9: #{tpu_custom_call.1} parent=1 // pred_fallthru
      _
    // Predicated region
    $region10: #{tpu_custom_call.1} parent=1 // pred_check
      _
    $region11: #{tpu_custom_call.1} parent=1 // pred_check_branch
      %40 = sbr.rel (0) target = $region13
    $region12: #{tpu_custom_call.1} parent=1 // pred_region
      _
    $region13: #{tpu_custom_call.1} parent=1 // pred_fallthru
      _
    // Predicated region
    $region14: #{tpu_custom_call.1} parent=1 // pred_check
      _
    $region15: #{tpu_custom_call.1} parent=1 // pred_check_branch
      %42 = sbr.rel (0) target = $region17
    $region16: #{tpu_custom_call.1} parent=1 // pred_region
      %s44 = ssub.s32 1024, 1024
      %45 = vsyncadd [#allocation6], %s44
      %s46 = sshll.u32 [#allocation7], 4
      %s47 = int_to_ptr.vmem [resolvable:$true] %s46
      %52 = dma.hbm_to_vmem [thread:$0]  %s3, 1024, %s47, [#allocation6], 64, 64, 4
    $region17: #{tpu_custom_call.1} parent=1 // pred_fallthru
      _
    // Predicated region
    $region18: #{tpu_custom_call.1} parent=1 // pred_check
      _
    $region19: #{tpu_custom_call.1} parent=1 // pred_check_branch
      %54 = sbr.rel (0) target = $region21
    $region20: #{tpu_custom_call.1} parent=1 // pred_region
      _
    $region21: #{tpu_custom_call.1} parent=1 // pred_fallthru
      _
    // Predicated region
    $region22: #{tpu_custom_call.1} parent=1 // pred_check
      _
    $region23: #{tpu_custom_call.1} parent=1 // pred_check_branch
      %56 = sbr.rel (0) target = $region25
    $region24: #{tpu_custom_call.1} parent=1 // pred_region
      %s58 = ssub.s32 1024, 1024
      %59 = vsyncadd [#allocation9], %s58
      %s60 = sshll.u32 [#allocation8], 4
      %s61 = int_to_ptr.vmem [resolvable:$true] %s60
      %66 = dma.hbm_to_vmem [thread:$0]  %s5, 1024, %s61, [#allocation9], 64, 64, 4
    $region25: #{tpu_custom_call.1} parent=1 // pred_fallthru
      _
    // Predicated region
    $region26: #{tpu_custom_call.1} parent=1 // pred_check
      _
    $region27: #{tpu_custom_call.1} parent=1 // pred_check_branch
      %68 = sbr.rel (0) target = $region29
    $region28: #{tpu_custom_call.1} parent=1 // pred_region
      %69 = dma.done [#allocation3], 128
    $region29: #{tpu_custom_call.1} parent=1 // pred_fallthru
      _
    // Predicated region
    $region30: #{tpu_custom_call.1} parent=1 // pred_check
      _
    $region31: #{tpu_custom_call.1} parent=1 // pred_check_branch
      %71 = sbr.rel (0) target = $region33
    $region32: #{tpu_custom_call.1} parent=1 // pred_region
      %72 = dma.done [#allocation6], 1024
    $region33: #{tpu_custom_call.1} parent=1 // pred_fallthru
      _
    // Predicated region
    $region34: #{tpu_custom_call.1} parent=1 // pred_check
      _
    $region35: #{tpu_custom_call.1} parent=1 // pred_check_branch
      %74 = sbr.rel (0) target = $region37
    $region36: #{tpu_custom_call.1} parent=1 // pred_region
      %75 = dma.done [#allocation6], 1024
    $region37: #{tpu_custom_call.1} parent=1 // pred_fallthru
      _
    // Predicated region
    $region38: #{tpu_custom_call.1} parent=1 // pred_check
      _
    $region39: #{tpu_custom_call.1} parent=1 // pred_check_branch
      %77 = sbr.rel (0) target = $region41
    $region40: #{tpu_custom_call.1} parent=1 // pred_region
      %78 = dma.done [#allocation9], 1024
    $region41: #{tpu_custom_call.1} parent=1 // pred_fallthru
      _
    %v80 = vld [vmem:[#allocation2] sm:$0xf]
    %v81 = vld [vmem:[#allocation2 + $0x4] sm:$0xf]
    %v82 = vld [vmem:[#allocation5] sm:$0xf]
    %v83 = vld [vmem:[#allocation5 + $0x4] sm:$0xf]
    %v84 = vld [vmem:[#allocation5 + $0x8] sm:$0xf]
    %v85 = vld [vmem:[#allocation5 + $0xc] sm:$0xf]
    %v86 = vld [vmem:[#allocation5 + $0x10] sm:$0xf]
    %v87 = vld [vmem:[#allocation5 + $0x14] sm:$0xf]
    %v88 = vld [vmem:[#allocation5 + $0x18] sm:$0xf]
    %v89 = vld [vmem:[#allocation5 + $0x1c] sm:$0xf]
    %v90 = vld [vmem:[#allocation5 + $0x20] sm:$0xf]
    %v91 = vld [vmem:[#allocation5 + $0x24] sm:$0xf]
    %v92 = vld [vmem:[#allocation5 + $0x28] sm:$0xf]
    %v93 = vld [vmem:[#allocation5 + $0x2c] sm:$0xf]
    %v94 = vld [vmem:[#allocation5 + $0x30] sm:$0xf]
    %v95 = vld [vmem:[#allocation5 + $0x34] sm:$0xf]
    %v96 = vld [vmem:[#allocation5 + $0x38] sm:$0xf]
    %v97 = vld [vmem:[#allocation5 + $0x3c] sm:$0xf]
    %v98 = vld [vmem:[%s2] sm:$0x1]
    %v100 = vlaneseq
    %v101 = vshrl.u32 %v100, 7
    %v102 = vsub.s32 0, %v101
    %v103 = vrot.slane %v98, %v102
    %v107 = vunpack.c.l.b16 %v80
    %v108 = vunpack.c.l.b16 %v81
    %v109 = vpack.c.b16 %v108, %v107
    %v127 = vunpack.c.l.b16 %v82
    %v128 = vunpack.c.l.b16 %v83
    %v129 = vunpack.c.l.b16 %v84
    %v130 = vunpack.c.l.b16 %v85
    %v131 = vunpack.c.l.b16 %v86
    %v132 = vunpack.c.l.b16 %v87
    %v133 = vunpack.c.l.b16 %v88
    %v134 = vunpack.c.l.b16 %v89
    %v135 = vunpack.c.l.b16 %v90
    %v136 = vunpack.c.l.b16 %v91
    %v137 = vunpack.c.l.b16 %v92
    %v138 = vunpack.c.l.b16 %v93
    %v139 = vunpack.c.l.b16 %v94
    %v140 = vunpack.c.l.b16 %v95
    %v141 = vunpack.c.l.b16 %v96
    %v142 = vunpack.c.l.b16 %v97
    %v143 = vpack.c.b16 %v128, %v127
    %v144 = vpack.c.b16 %v130, %v129
    %v145 = vpack.c.b16 %v132, %v131
    %v146 = vpack.c.b16 %v134, %v133
    %v147 = vpack.c.b16 %v136, %v135
    %v148 = vpack.c.b16 %v138, %v137
    %v149 = vpack.c.b16 %v140, %v139
    %v150 = vpack.c.b16 %v142, %v141
    %159 = vmatprep.subr.bf16.mxu0 0
    %160 = vmatpush1.bf16.msra.mxu0 %v150
    %161 = vmatprep.subr.bf16.mxu0 0
    %162 = vmatpush1.bf16.msra.mxu0 %v149
    %163 = vmatprep.subr.bf16.mxu0 0
    %164 = vmatpush1.bf16.msra.mxu0 %v148
    %165 = vmatprep.subr.bf16.mxu0 0
    %166 = vmatpush1.bf16.msra.mxu0 %v147
    %167 = vmatprep.subr.bf16.mxu0 0
    %168 = vmatpush1.bf16.msra.mxu0 %v146
    %169 = vmatprep.subr.bf16.mxu0 0
    %170 = vmatpush1.bf16.msra.mxu0 %v145
    %171 = vmatprep.subr.bf16.mxu0 0
    %172 = vmatpush1.bf16.msra.mxu0 %v144
    %173 = vmatprep.subr.bf16.mxu0 0
    %174 = vmatpush1.bf16.msra.mxu0 %v143
    %175 = vmatprep.subr.bf16.mxu0 0
    %176 = vmatpush2.bf16.msra.mxu0 0
    %177 = vmatprep.subr.bf16.mxu0 0
    %178 = vmatpush2.bf16.msra.mxu0 0
    %179 = vmatprep.subr.bf16.mxu0 0
    %180 = vmatpush2.bf16.msra.mxu0 0
    %181 = vmatprep.subr.bf16.mxu0 0
    %182 = vmatpush2.bf16.msra.mxu0 0
    %183 = vmatprep.subr.bf16.mxu0 0
    %184 = vmatpush2.bf16.msra.mxu0 0
    %185 = vmatprep.subr.bf16.mxu0 0
    %186 = vmatpush2.bf16.msra.mxu0 0
    %187 = vmatprep.subr.bf16.mxu0 0
    %188 = vmatpush2.bf16.msra.mxu0 0
    %189 = vmatprep.subr.bf16.mxu0 0
    %190 = vmatpush2.bf16.msra.mxu0 0
    %191 = vmatprep.mubr.bf16.mxu0 0
    %192 = vmatmul.mubr.bf16.gmra.mxu0 %v109
    %v193 = vpop.f32.mrf.mxu0
    %v194 = vadd.f32 %v103, %v193
    %v195 = vpop.f32.mrf.mxu0
    %v196 = vpop.f32.mrf.mxu0
    %v197 = vadd.f32 %v103, %v196
    %v198 = vpop.f32.mrf.mxu0
    %199 = vdwg.mxu0
    %v200 = vpack.c.bf16 %v197, %v194
    %v201 = vld [vmem:[#allocation7] sm:$0xf]
    %v202 = vld [vmem:[#allocation7 + $0x4] sm:$0xf]
    %v203 = vld [vmem:[#allocation7 + $0x8] sm:$0xf]
    %v204 = vld [vmem:[#allocation7 + $0xc] sm:$0xf]
    %v205 = vld [vmem:[#allocation7 + $0x10] sm:$0xf]
    %v206 = vld [vmem:[#allocation7 + $0x14] sm:$0xf]
    %v207 = vld [vmem:[#allocation7 + $0x18] sm:$0xf]
    %v208 = vld [vmem:[#allocation7 + $0x1c] sm:$0xf]
    %v209 = vld [vmem:[#allocation7 + $0x20] sm:$0xf]
    %v210 = vld [vmem:[#allocation7 + $0x24] sm:$0xf]
    %v211 = vld [vmem:[#allocation7 + $0x28] sm:$0xf]
    %v212 = vld [vmem:[#allocation7 + $0x2c] sm:$0xf]
    %v213 = vld [vmem:[#allocation7 + $0x30] sm:$0xf]
    %v214 = vld [vmem:[#allocation7 + $0x34] sm:$0xf]
    %v215 = vld [vmem:[#allocation7 + $0x38] sm:$0xf]
    %v216 = vld [vmem:[#allocation7 + $0x3c] sm:$0xf]
    %v217 = vld [vmem:[%s4] sm:$0x1]
    %v219 = vlaneseq
    %v220 = vshrl.u32 %v219, 7
    %v221 = vsub.s32 0, %v220
    %v222 = vrot.slane %v217, %v221
    %v240 = vunpack.c.l.b16 %v201
    %v241 = vunpack.c.l.b16 %v202
    %v242 = vunpack.c.l.b16 %v203
    %v243 = vunpack.c.l.b16 %v204
    %v244 = vunpack.c.l.b16 %v205
    %v245 = vunpack.c.l.b16 %v206
    %v246 = vunpack.c.l.b16 %v207
    %v247 = vunpack.c.l.b16 %v208
    %v248 = vunpack.c.l.b16 %v209
    %v249 = vunpack.c.l.b16 %v210
    %v250 = vunpack.c.l.b16 %v211
    %v251 = vunpack.c.l.b16 %v212
    %v252 = vunpack.c.l.b16 %v213
    %v253 = vunpack.c.l.b16 %v214
    %v254 = vunpack.c.l.b16 %v215
    %v255 = vunpack.c.l.b16 %v216
    %v256 = vpack.c.b16 %v241, %v240
    %v257 = vpack.c.b16 %v243, %v242
    %v258 = vpack.c.b16 %v245, %v244
    %v259 = vpack.c.b16 %v247, %v246
    %v260 = vpack.c.b16 %v249, %v248
    %v261 = vpack.c.b16 %v251, %v250
    %v262 = vpack.c.b16 %v253, %v252
    %v263 = vpack.c.b16 %v255, %v254
    %272 = vmatprep.subr.bf16.mxu0 0
    %273 = vmatpush1.bf16.msra.mxu0 %v263
    %274 = vmatprep.subr.bf16.mxu0 0
    %275 = vmatpush1.bf16.msra.mxu0 %v262
    %276 = vmatprep.subr.bf16.mxu0 0
    %277 = vmatpush1.bf16.msra.mxu0 %v261
    %278 = vmatprep.subr.bf16.mxu0 0
    %279 = vmatpush1.bf16.msra.mxu0 %v260
    %280 = vmatprep.subr.bf16.mxu0 0
    %281 = vmatpush1.bf16.msra.mxu0 %v259
    %282 = vmatprep.subr.bf16.mxu0 0
    %283 = vmatpush1.bf16.msra.mxu0 %v258
    %284 = vmatprep.subr.bf16.mxu0 0
    %285 = vmatpush1.bf16.msra.mxu0 %v257
    %286 = vmatprep.subr.bf16.mxu0 0
    %287 = vmatpush1.bf16.msra.mxu0 %v256
    %288 = vmatprep.subr.bf16.mxu0 0
    %289 = vmatpush2.bf16.msra.mxu0 0
    %290 = vmatprep.subr.bf16.mxu0 0
    %291 = vmatpush2.bf16.msra.mxu0 0
    %292 = vmatprep.subr.bf16.mxu0 0
    %293 = vmatpush2.bf16.msra.mxu0 0
    %294 = vmatprep.subr.bf16.mxu0 0
    %295 = vmatpush2.bf16.msra.mxu0 0
    %296 = vmatprep.subr.bf16.mxu0 0
    %297 = vmatpush2.bf16.msra.mxu0 0
    %298 = vmatprep.subr.bf16.mxu0 0
    %299 = vmatpush2.bf16.msra.mxu0 0
    %300 = vmatprep.subr.bf16.mxu0 0
    %301 = vmatpush2.bf16.msra.mxu0 0
    %302 = vmatprep.subr.bf16.mxu0 0
    %303 = vmatpush2.bf16.msra.mxu0 0
    %304 = vmatprep.mubr.bf16.mxu0 0
    %305 = vmatmul.mubr.bf16.gmra.mxu0 %v200
    %v306 = vpop.f32.mrf.mxu0
    %v307 = vadd.f32 %v222, %v306
    %v308 = vpop.f32.mrf.mxu0
    %v309 = vpop.f32.mrf.mxu0
    %v310 = vadd.f32 %v222, %v309
    %v311 = vpop.f32.mrf.mxu0
    %312 = vdwg.mxu0
    %v313 = vmax.f32 %v307, 0.0
    %v314 = vmax.f32 %v310, 0.0
    %v315 = vpack.c.bf16 %v314, %v313
    %v316 = vld [vmem:[#allocation8] sm:$0xf]
    %v317 = vld [vmem:[#allocation8 + $0x4] sm:$0xf]
    %v318 = vld [vmem:[#allocation8 + $0x8] sm:$0xf]
    %v319 = vld [vmem:[#allocation8 + $0xc] sm:$0xf]
    %v320 = vld [vmem:[#allocation8 + $0x10] sm:$0xf]
    %v321 = vld [vmem:[#allocation8 + $0x14] sm:$0xf]
    %v322 = vld [vmem:[#allocation8 + $0x18] sm:$0xf]
    %v323 = vld [vmem:[#allocation8 + $0x1c] sm:$0xf]
    %v324 = vld [vmem:[#allocation8 + $0x20] sm:$0xf]
    %v325 = vld [vmem:[#allocation8 + $0x24] sm:$0xf]
    %v326 = vld [vmem:[#allocation8 + $0x28] sm:$0xf]
    %v327 = vld [vmem:[#allocation8 + $0x2c] sm:$0xf]
    %v328 = vld [vmem:[#allocation8 + $0x30] sm:$0xf]
    %v329 = vld [vmem:[#allocation8 + $0x34] sm:$0xf]
    %v330 = vld [vmem:[#allocation8 + $0x38] sm:$0xf]
    %v331 = vld [vmem:[#allocation8 + $0x3c] sm:$0xf]
    %v348 = vunpack.c.l.b16 %v316
    %v349 = vunpack.c.l.b16 %v317
    %v350 = vunpack.c.l.b16 %v318
    %v351 = vunpack.c.l.b16 %v319
    %v352 = vunpack.c.l.b16 %v320
    %v353 = vunpack.c.l.b16 %v321
    %v354 = vunpack.c.l.b16 %v322
    %v355 = vunpack.c.l.b16 %v323
    %v356 = vunpack.c.l.b16 %v324
    %v357 = vunpack.c.l.b16 %v325
    %v358 = vunpack.c.l.b16 %v326
    %v359 = vunpack.c.l.b16 %v327
    %v360 = vunpack.c.l.b16 %v328
    %v361 = vunpack.c.l.b16 %v329
    %v362 = vunpack.c.l.b16 %v330
    %v363 = vunpack.c.l.b16 %v331
    %v364 = vpack.c.b16 %v349, %v348
    %v365 = vpack.c.b16 %v351, %v350
    %v366 = vpack.c.b16 %v353, %v352
    %v367 = vpack.c.b16 %v355, %v354
    %v368 = vpack.c.b16 %v357, %v356
    %v369 = vpack.c.b16 %v359, %v358
    %v370 = vpack.c.b16 %v361, %v360
    %v371 = vpack.c.b16 %v363, %v362
    %380 = vmatprep.subr.bf16.mxu0 0
    %381 = vmatpush1.bf16.msra.mxu0 %v371
    %382 = vmatprep.subr.bf16.mxu0 0
    %383 = vmatpush1.bf16.msra.mxu0 %v370
    %384 = vmatprep.subr.bf16.mxu0 0
    %385 = vmatpush1.bf16.msra.mxu0 %v369
    %386 = vmatprep.subr.bf16.mxu0 0
    %387 = vmatpush1.bf16.msra.mxu0 %v368
    %388 = vmatprep.subr.bf16.mxu0 0
    %389 = vmatpush1.bf16.msra.mxu0 %v367
    %390 = vmatprep.subr.bf16.mxu0 0
    %391 = vmatpush1.bf16.msra.mxu0 %v366
    %392 = vmatprep.subr.bf16.mxu0 0
    %393 = vmatpush1.bf16.msra.mxu0 %v365
    %394 = vmatprep.subr.bf16.mxu0 0
    %395 = vmatpush1.bf16.msra.mxu0 %v364
    %396 = vmatprep.subr.bf16.mxu0 0
    %397 = vmatpush2.bf16.msra.mxu0 0
    %398 = vmatprep.subr.bf16.mxu0 0
    %399 = vmatpush2.bf16.msra.mxu0 0
    %400 = vmatprep.subr.bf16.mxu0 0
    %401 = vmatpush2.bf16.msra.mxu0 0
    %402 = vmatprep.subr.bf16.mxu0 0
    %403 = vmatpush2.bf16.msra.mxu0 0
    %404 = vmatprep.subr.bf16.mxu0 0
    %405 = vmatpush2.bf16.msra.mxu0 0
    %406 = vmatprep.subr.bf16.mxu0 0
    %407 = vmatpush2.bf16.msra.mxu0 0
    %408 = vmatprep.subr.bf16.mxu0 0
    %409 = vmatpush2.bf16.msra.mxu0 0
    %410 = vmatprep.subr.bf16.mxu0 0
    %411 = vmatpush2.bf16.msra.mxu0 0
    %412 = vmatprep.mubr.bf16.mxu0 0
    %413 = vmatmul.mubr.bf16.gmra.mxu0 %v315
    %v414 = vpop.f32.mrf.mxu0
    %v415 = vadd.f32 0.0, %v414
    %v416 = vpop.f32.mrf.mxu0
    %v417 = vpop.f32.mrf.mxu0
    %v418 = vadd.f32 0.0, %v417
    %v419 = vpop.f32.mrf.mxu0
    %420 = vdwg.mxu0
    %421 = vst [vmem:[#allocation10] sm:$0xff] %v415
    %422 = vst [vmem:[#allocation10 + $0x8] sm:$0xff] %v418
    // Predicated region
    $region42: #{tpu_custom_call.1} parent=1 // pred_check
      _
    $region43: #{tpu_custom_call.1} parent=1 // pred_check_branch
      %424 = sbr.rel (0) target = $region45
    $region44: #{tpu_custom_call.1} parent=1 // pred_region
      %s426 = ssub.s32 256, 256
      %427 = vsyncadd [#allocation4], %s426
      %s428 = sshll.u32 [#allocation10], 4
      %s429 = int_to_ptr.vmem [resolvable:$true] %s428
      %434 = dma.vmem_to_hbm [thread:$0]  %s429, 256, %s6, [#allocation4], 128, 128, 8
    $region45: #{tpu_custom_call.1} parent=1 // pred_fallthru
      _
    // Predicated region
    $region46: #{tpu_custom_call.1} parent=1 // pred_check
      _
    $region47: #{tpu_custom_call.1} parent=1 // pred_check_branch
      %436 = sbr.rel (0) target = $region49
    $region48: #{tpu_custom_call.1} parent=1 // pred_region
      %437 = dma.done [#allocation4], 256
    $region49: #{tpu_custom_call.1} parent=1 // pred_fallthru
      _
    %438 = vsyncpa [#allocation3], 1
    %439 = vsyncpa [#allocation6], 1
    %440 = vsyncpa [#allocation9], 1
    %441 = vsyncpa [#allocation4], 1

</llo_original>
